<compile_context>
chip_gen: v6e
topology: v6e:2x2x1
jax: 0.10.0
libtpu: 0.0.40
codegen_flags: <defaults>
</compile_context>

<pallas_src>
import jax
import jax.numpy as jnp
from jax.experimental import pallas as pl
from jax.experimental.pallas import tpu as pltpu


def _mfa_kernel(x_ref, out_ref):
    # x_ref block: (TB, Q, C); out_ref block: (TB, 2*C)
    x = x_ref[...].astype(jnp.float32)                    # (TB, Q, C)
    tb, q, _ = x.shape

    # c1: mean over the query axis (sublane reduction), for every batch row.
    mean = jnp.mean(x, axis=1, keepdims=True)             # (TB, 1, C)

    # Squared Euclidean distance of every query to its row mean (lane
    # reduction over C).  argmax(sqrt(d2)) == argmax(d2), so sqrt is skipped.
    diff = x - mean
    d2 = jnp.sum(diff * diff, axis=2)                     # (TB, Q)

    # First index achieving the max distance (torch argmax tie rule),
    # fully vectorized in vregs across the TB rows.
    # TODO(synk): all-NaN distance rows fall back to a zero row instead of
    # propagating NaN like torch.argmax would (pathological inputs only).
    m = jnp.max(d2, axis=1, keepdims=True)                # (TB, 1)
    q_ids = jax.lax.broadcasted_iota(jnp.int32, (tb, q), 1)
    cand = jnp.where(d2 >= m, q_ids, jnp.int32(q))
    idx = jnp.min(cand, axis=1, keepdims=True)            # (TB, 1)

    # Gather the farthest row per batch entry via a one-hot mask.
    onehot = (q_ids == idx).astype(jnp.float32)           # (TB, Q)
    c2 = jnp.sum(onehot[:, :, None] * x, axis=1)          # (TB, C)

    # Single lane-dense store: [mean | farthest] packed along the last dim.
    out = jnp.concatenate([mean[:, 0, :], c2], axis=1)    # (TB, 2*C)
    out_ref[...] = out.astype(out_ref.dtype)


def _pick_tile(B, Q, C, itemsize, budget_bytes=4 << 20, tb_max=1024):
    """Rows per grid step: biggest multiple of 8 whose input tile fits the
    VMEM budget (leaves room for double-buffering + f32 temporaries)."""
    row_bytes = max(1, Q * C * itemsize)
    tb = budget_bytes // row_bytes
    tb = max(8, min(tb, tb_max))
    tb = min(tb, ((B + 7) // 8) * 8)       # don't over-allocate for tiny B
    tb = max(8, (tb // 8) * 8)             # sublane-aligned output leading dim
    return tb


def mean_farthest_assignment(hs_pair):
    L, N, Q, C = hs_pair.shape
    B = L * N
    x = hs_pair.reshape(B, Q, C)

    TB = _pick_tile(B, Q, C, hs_pair.dtype.itemsize)
    n_blocks = pl.cdiv(B, TB)
    B_pad = n_blocks * TB
    if B_pad != B:
        x = jnp.pad(x, ((0, B_pad - B), (0, 0), (0, 0)))

    out = pl.pallas_call(
        _mfa_kernel,
        out_shape=jax.ShapeDtypeStruct((B_pad, 2 * C), hs_pair.dtype),
        grid_spec=pltpu.PrefetchScalarGridSpec(
            num_scalar_prefetch=0,
            grid=(n_blocks,),
            in_specs=[pl.BlockSpec((TB, Q, C), lambda b: (b, 0, 0))],
            out_specs=pl.BlockSpec((TB, 2 * C), lambda b: (b, 0)),
        ),
        compiler_params=pltpu.CompilerParams(
            dimension_semantics=("parallel",),   # megacore-shard B on v7x
            vmem_limit_bytes=48 << 20,
        ),
    )(x)

    return out[:B].reshape(L, N, 2, C)


if __name__ == "__main__":
    key = jax.random.PRNGKey(0)
    L, N, Q, C = 2, 3, 8, 32  # small shapes; hidden_dim (C) is arbitrary here
    hs_pair = jax.random.normal(key, (L, N, Q, C), dtype=jnp.float32)

    centers = mean_farthest_assignment(hs_pair)
    jax.block_until_ready(centers)

    # pure-JAX reference check (same math as the torch module)
    c1 = jnp.mean(hs_pair, axis=2, keepdims=True)
    d = jnp.sqrt(jnp.sum((hs_pair - c1) ** 2, axis=-1))      # (L, N, Q)
    idx = jnp.argmax(d, axis=-1)                             # (L, N)
    c2 = jnp.take_along_axis(hs_pair, idx[:, :, None, None], axis=2)
    ref = jnp.concatenate([c1, c2], axis=2)                  # (L, N, 2, C)

    assert centers.shape == (L, N, 2, C)
    assert centers.dtype == hs_pair.dtype
    assert jnp.allclose(centers, ref, atol=1e-5)
    print("KERNEL_OK")
</pallas_src>

<mosaic_0001>
module attributes {stable_mosaic.version = 11 : i64} {
  func.func @_mfa_kernel(%arg0: i32, %arg1: memref<8x8x32xf32, #tpu.memory_space<vmem>>, %arg2: memref<8x64xf32, #tpu.memory_space<vmem>>) attributes {dimension_semantics = [#tpu.dimension_semantics<parallel>], iteration_bounds = array<i64: 1>, scalar_prefetch = 0 : i64, scratch_operands = 0 : i64, tpu.core_type = #tpu.core_type<tc>, window_params = [{transform_indices = @transform_0, window_bounds = array<i64: 8, 8, 32>}, {transform_indices = @transform_1, window_bounds = array<i64: 8, 64>}]} {
    %c0 = arith.constant 0 : index
    %c0_0 = arith.constant 0 : index
    %c0_1 = arith.constant 0 : index
    %0 = vector.load %arg1[%c0, %c0_0, %c0_1] : memref<8x8x32xf32, #tpu.memory_space<vmem>>, vector<8x8x32xf32>
    %cst = arith.constant dense<0.000000e+00> : vector<8x32xf32>
    %1 = vector.multi_reduction <add>, %0, %cst [1] : vector<8x8x32xf32> to vector<8x32xf32>
    %2 = vector.shape_cast %1 : vector<8x32xf32> to vector<8x1x32xf32>
    %cst_2 = arith.constant 8.000000e+00 : f32
    %3 = vector.broadcast %cst_2 : f32 to vector<8x1x32xf32>
    %4 = arith.divf %2, %3 : vector<8x1x32xf32>
    %5 = vector.broadcast %4 : vector<8x1x32xf32> to vector<8x8x32xf32>
    %6 = arith.subf %0, %5 : vector<8x8x32xf32>
    %7 = arith.mulf %6, %6 : vector<8x8x32xf32>
    %cst_3 = arith.constant dense<0.000000e+00> : vector<8x8xf32>
    %8 = vector.multi_reduction <add>, %7, %cst_3 [2] : vector<8x8x32xf32> to vector<8x8xf32>
    %cst_4 = arith.constant dense<0xFF800000> : vector<8xf32>
    %9 = vector.multi_reduction <maximumf>, %8, %cst_4 [1] : vector<8x8xf32> to vector<8xf32>
    %10 = vector.shape_cast %9 : vector<8xf32> to vector<8x1xf32>
    %11 = tpu.iota {dimensions = array<i32: 1>} : vector<8x8xi32>
    %12 = vector.broadcast %10 : vector<8x1xf32> to vector<8x8xf32>
    %13 = arith.cmpf oge, %8, %12 : vector<8x8xf32>
    %c8_i32 = arith.constant 8 : i32
    %14 = vector.broadcast %c8_i32 : i32 to vector<8x8xi32>
    %15 = arith.select %13, %11, %14 : vector<8x8xi1>, vector<8x8xi32>
    %cst_5 = arith.constant dense<2147483647> : vector<8xi32>
    %16 = vector.multi_reduction <minsi>, %15, %cst_5 [1] : vector<8x8xi32> to vector<8xi32>
    %17 = vector.shape_cast %16 : vector<8xi32> to vector<8x1xi32>
    %18 = vector.broadcast %17 : vector<8x1xi32> to vector<8x8xi32>
    %19 = arith.cmpi eq, %11, %18 : vector<8x8xi32>
    %20 = arith.extui %19 : vector<8x8xi1> to vector<8x8xi32>
    %21 = arith.sitofp %20 : vector<8x8xi32> to vector<8x8xf32>
    %22 = vector.shape_cast %21 : vector<8x8xf32> to vector<8x8x1xf32>
    %23 = vector.broadcast %22 : vector<8x8x1xf32> to vector<8x8x32xf32>
    %24 = arith.mulf %23, %0 : vector<8x8x32xf32>
    %cst_6 = arith.constant dense<0.000000e+00> : vector<8x32xf32>
    %25 = vector.multi_reduction <add>, %24, %cst_6 [1] : vector<8x8x32xf32> to vector<8x32xf32>
    %26 = vector.shape_cast %4 : vector<8x1x32xf32> to vector<8x32xf32>
    %27 = tpu.concatenate %26, %25 in 1 : vector<8x32xf32>, vector<8x32xf32> -> vector<8x64xf32>
    %c0_7 = arith.constant 0 : index
    %c0_8 = arith.constant 0 : index
    %28 = vector.load %arg2[%c0_7, %c0_8] : memref<8x64xf32, #tpu.memory_space<vmem>>, vector<8x64xf32>
    tpu.vector_store %arg2[%c0_7, %c0_8], %27 {strides = array<i32>} : memref<8x64xf32, #tpu.memory_space<vmem>>, vector<8x64xf32>,
    return
  }
  func.func @transform_0(%arg0: i32) -> (i32, i32, i32) {
    %c0_i32 = arith.constant 0 : i32
    %c0_i32_0 = arith.constant 0 : i32
    %c0_i32_1 = arith.constant 0 : i32
    return %arg0, %c0_i32, %c0_i32_0 : i32, i32, i32
  }
  func.func @transform_1(%arg0: i32) -> (i32, i32) {
    %c0_i32 = arith.constant 0 : i32
    %c0_i32_0 = arith.constant 0 : i32
    return %arg0, %c0_i32 : i32, i32
  }
}

</mosaic_0001>

<llo_original>
// kernel: tpu_custom_call.1
$region0: #{tpu_custom_call.1}
  #allocation0 [shape = 'u32[]', space=smem, size = 0x4, offset = 0x4, fixed_abs, tag = 'smem constant byte address 0x4 - core index']
  #allocation1 [shape = 'u32[144,128]{1,0:T(1,128)}', space=vmem, size = 0x12000, scoped, tag = 'internal scratch']
  %s0 = inlined_call_operand.hbm [shape: f32[8,8,32], index: 0, kind: input, shape index: {}]
  %s1 = inlined_call_operand.hbm [shape: f32[8,64], index: 1, kind: output, shape index: {}]
  %s2 = sld [smem:[#allocation0]]
  $region18: #{tpu_custom_call.1} parent=0
    _
  %s4 = ssub.s32 1, %s2
  %s5 = scalar_select 0, %s4, %s2
  $region1: #{tpu_custom_call.1} parent=0
    #allocation2 [shape = 'u8[32768]{0}', space=vmem, size = 0x8000, scoped, tag = 'input window, operand 0, single buffered']
    #allocation3 [shape = 's32[1]{0}', space=sflag, size = 0x4, scoped, tag = 'scoped memory for tpu_custom_call.1']
    #allocation4 [shape = 's32[1]{0}', space=sflag, size = 0x4, scoped, tag = 'scoped memory for tpu_custom_call.1']
    #allocation5 [shape = 'u8[4096]{0}', space=vmem, size = 0x1000, scoped, tag = 'output window, operand 0, single buffered']
    %6 = vsyncpa [#allocation3], 0
    %7 = vsyncpa [#allocation4], 0
    // Predicated region
    $region2: #{tpu_custom_call.1} parent=1 // pred_check
      _
    $region3: #{tpu_custom_call.1} parent=1 // pred_check_branch
      %9 = sbr.rel (0) target = $region5
    $region4: #{tpu_custom_call.1} parent=1 // pred_region
      %s11 = ssub.s32 1024, 1024
      %12 = vsyncadd [#allocation3], %s11
      %s13 = sshll.u32 [#allocation2], 4
      %s14 = int_to_ptr.vmem [resolvable:$true] %s13
      %19 = dma.hbm_to_vmem [thread:$0]  %s0, 1024, %s14, [#allocation3], 128, 128, 8
    $region5: #{tpu_custom_call.1} parent=1 // pred_fallthru
      _
    // Predicated region
    $region6: #{tpu_custom_call.1} parent=1 // pred_check
      _
    $region7: #{tpu_custom_call.1} parent=1 // pred_check_branch
      %21 = sbr.rel (0) target = $region9
    $region8: #{tpu_custom_call.1} parent=1 // pred_region
      %22 = dma.done [#allocation3], 1024
    $region9: #{tpu_custom_call.1} parent=1 // pred_fallthru
      _
    %v23 = vld [vmem:[#allocation2] sm:$0xff]
    %v24 = vld [vmem:[#allocation2 + $0x8] sm:$0xff]
    %v25 = vld [vmem:[#allocation2 + $0x10] sm:$0xff]
    %v26 = vld [vmem:[#allocation2 + $0x18] sm:$0xff]
    %v27 = vld [vmem:[#allocation2 + $0x20] sm:$0xff]
    %v28 = vld [vmem:[#allocation2 + $0x28] sm:$0xff]
    %v29 = vld [vmem:[#allocation2 + $0x30] sm:$0xff]
    %v30 = vld [vmem:[#allocation2 + $0x38] sm:$0xff]
    %vm31 = vcmask 261120
    %v32 = vsel %vm31, %v23, 0.0
    %v33 = vrot.slane %v32, 4
    %v34 = vadd.f32 %v32, %v33
    %v35 = vrot.slane %v34, 2
    %v36 = vadd.f32 %v34, %v35
    %v37 = vrot.slane %v36, 1
    %v38 = vadd.f32 %v36, %v37
    %v39 = vsel %vm31, %v24, 0.0
    %v40 = vrot.slane %v39, 4
    %v41 = vadd.f32 %v39, %v40
    %v42 = vrot.slane %v41, 2
    %v43 = vadd.f32 %v41, %v42
    %v44 = vrot.slane %v43, 1
    %v45 = vadd.f32 %v43, %v44
    %v46 = vsel %vm31, %v25, 0.0
    %v47 = vrot.slane %v46, 4
    %v48 = vadd.f32 %v46, %v47
    %v49 = vrot.slane %v48, 2
    %v50 = vadd.f32 %v48, %v49
    %v51 = vrot.slane %v50, 1
    %v52 = vadd.f32 %v50, %v51
    %v53 = vsel %vm31, %v26, 0.0
    %v54 = vrot.slane %v53, 4
    %v55 = vadd.f32 %v53, %v54
    %v56 = vrot.slane %v55, 2
    %v57 = vadd.f32 %v55, %v56
    %v58 = vrot.slane %v57, 1
    %v59 = vadd.f32 %v57, %v58
    %v60 = vsel %vm31, %v27, 0.0
    %v61 = vrot.slane %v60, 4
    %v62 = vadd.f32 %v60, %v61
    %v63 = vrot.slane %v62, 2
    %v64 = vadd.f32 %v62, %v63
    %v65 = vrot.slane %v64, 1
    %v66 = vadd.f32 %v64, %v65
    %v67 = vsel %vm31, %v28, 0.0
    %v68 = vrot.slane %v67, 4
    %v69 = vadd.f32 %v67, %v68
    %v70 = vrot.slane %v69, 2
    %v71 = vadd.f32 %v69, %v70
    %v72 = vrot.slane %v71, 1
    %v73 = vadd.f32 %v71, %v72
    %v74 = vsel %vm31, %v29, 0.0
    %v75 = vrot.slane %v74, 4
    %v76 = vadd.f32 %v74, %v75
    %v77 = vrot.slane %v76, 2
    %v78 = vadd.f32 %v76, %v77
    %v79 = vrot.slane %v78, 1
    %v80 = vadd.f32 %v78, %v79
    %v81 = vsel %vm31, %v30, 0.0
    %v82 = vrot.slane %v81, 4
    %v83 = vadd.f32 %v81, %v82
    %v84 = vrot.slane %v83, 2
    %v85 = vadd.f32 %v83, %v84
    %v86 = vrot.slane %v85, 1
    %v87 = vadd.f32 %v85, %v86
    %v88 = vrcp.pop 8.0
    %v89 = vmul.f32 %v38, %v88
    %v90 = vmul.f32 %v45, %v88
    %v91 = vmul.f32 %v52, %v88
    %v92 = vmul.f32 %v59, %v88
    %v93 = vmul.f32 %v66, %v88
    %v94 = vmul.f32 %v73, %v88
    %v95 = vmul.f32 %v80, %v88
    %v96 = vmul.f32 %v87, %v88
    %v97 = vsub.f32 %v23, %v89
    %v98 = vsub.f32 %v24, %v90
    %v99 = vsub.f32 %v25, %v91
    %v100 = vsub.f32 %v26, %v92
    %v101 = vsub.f32 %v27, %v93
    %v102 = vsub.f32 %v28, %v94
    %v103 = vsub.f32 %v29, %v95
    %v104 = vsub.f32 %v30, %v96
    %v105 = vmul.f32 %v97, %v97
    %v106 = vmul.f32 %v98, %v98
    %v107 = vmul.f32 %v99, %v99
    %v108 = vmul.f32 %v100, %v100
    %v109 = vmul.f32 %v101, %v101
    %v110 = vmul.f32 %v102, %v102
    %v111 = vmul.f32 %v103, %v103
    %v112 = vmul.f32 %v104, %v104
    %v113 = vsel %vm31, %v105, 0.0
    %114 = vadd.xlane.f32.xlu0 %v113
    %v115 = vpop.xlane.xlu0 %114
    %v116 = vsel %vm31, %v106, 0.0
    %117 = vadd.xlane.f32.xlu0 %v116
    %v118 = vpop.xlane.xlu0 %117
    %v119 = vsel %vm31, %v107, 0.0
    %120 = vadd.xlane.f32.xlu0 %v119
    %v121 = vpop.xlane.xlu0 %120
    %v122 = vsel %vm31, %v108, 0.0
    %123 = vadd.xlane.f32.xlu0 %v122
    %v124 = vpop.xlane.xlu0 %123
    %v125 = vsel %vm31, %v109, 0.0
    %126 = vadd.xlane.f32.xlu0 %v125
    %v127 = vpop.xlane.xlu0 %126
    %v128 = vsel %vm31, %v110, 0.0
    %129 = vadd.xlane.f32.xlu0 %v128
    %v130 = vpop.xlane.xlu0 %129
    %v131 = vsel %vm31, %v111, 0.0
    %132 = vadd.xlane.f32.xlu0 %v131
    %v133 = vpop.xlane.xlu0 %132
    %v134 = vsel %vm31, %v112, 0.0
    %135 = vadd.xlane.f32.xlu0 %v134
    %v136 = vpop.xlane.xlu0 %135
    %v145 = vlaneseq
    %v146 = vand.u32 %v145, 127
    %v147 = vlaneseq
    %v148 = vshrl.u32 %v147, 7
    %v149 = vsub.s32 %v146, %v148
    %v150 = vrot.slane %v115, %v149
    %v151 = vlaneseq
    %v152 = vshrl.u32 %v151, 7
    %v153 = vsub.s32 %v146, %v152
    %v154 = vrot.slane %v118, %v153
    %v155 = vlaneseq
    %v156 = vshrl.u32 %v155, 7
    %v157 = vsub.s32 %v146, %v156
    %v158 = vrot.slane %v121, %v157
    %v159 = vlaneseq
    %v160 = vshrl.u32 %v159, 7
    %v161 = vsub.s32 %v146, %v160
    %v162 = vrot.slane %v124, %v161
    %v163 = vlaneseq
    %v164 = vshrl.u32 %v163, 7
    %v165 = vsub.s32 %v146, %v164
    %v166 = vrot.slane %v127, %v165
    %v167 = vlaneseq
    %v168 = vshrl.u32 %v167, 7
    %v169 = vsub.s32 %v146, %v168
    %v170 = vrot.slane %v130, %v169
    %v171 = vlaneseq
    %v172 = vshrl.u32 %v171, 7
    %v173 = vsub.s32 %v146, %v172
    %v174 = vrot.slane %v133, %v173
    %v175 = vlaneseq
    %v176 = vshrl.u32 %v175, 7
    %v177 = vsub.s32 %v146, %v176
    %v178 = vrot.slane %v136, %v177
    %vm179 = vcmask 1041409
    %v180 = vsel %vm179, %v154, %v150
    %vm181 = vcmask 1042434
    %v182 = vsel %vm181, %v158, %v180
    %vm183 = vcmask 1043459
    %v184 = vsel %vm183, %v162, %v182
    %vm185 = vcmask 1044484
    %v186 = vsel %vm185, %v166, %v184
    %vm187 = vcmask 1045509
    %v188 = vsel %vm187, %v170, %v186
    %vm189 = vcmask 1046534
    %v190 = vsel %vm189, %v174, %v188
    %vm191 = vcmask 1047559
    %v192 = vsel %vm191, %v178, %v190
    %vm194 = vcmask 64512
    %v195 = vsel %vm194, %v192, -inf
    %196 = vmax.xlane.f32.xlu0 %v195
    %v197 = vpop.xlane.xlu0 %196
    %v199 = vlaneseq
    %v200 = vshrl.u32 %v199, 7
    %v201 = vsub.s32 0, %v200
    %v202 = vrot.slane %v197, %v201
    %v203 = vlaneseq
    %v204 = vshrl.u32 %v203, 7
    %v205 = vsub.s32 1, %v204
    %v206 = vrot.slane %v197, %v205
    %v207 = vlaneseq
    %v208 = vshrl.u32 %v207, 7
    %v209 = vsub.s32 2, %v208
    %v210 = vrot.slane %v197, %v209
    %v211 = vlaneseq
    %v212 = vshrl.u32 %v211, 7
    %v213 = vsub.s32 3, %v212
    %v214 = vrot.slane %v197, %v213
    %v215 = vlaneseq
    %v216 = vshrl.u32 %v215, 7
    %v217 = vsub.s32 4, %v216
    %v218 = vrot.slane %v197, %v217
    %v219 = vlaneseq
    %v220 = vshrl.u32 %v219, 7
    %v221 = vsub.s32 5, %v220
    %v222 = vrot.slane %v197, %v221
    %v223 = vlaneseq
    %v224 = vshrl.u32 %v223, 7
    %v225 = vsub.s32 6, %v224
    %v226 = vrot.slane %v197, %v225
    %v227 = vlaneseq
    %v228 = vshrl.u32 %v227, 7
    %v229 = vsub.s32 7, %v228
    %v230 = vrot.slane %v197, %v229
    %vm239 = vcmp.ge.f32.partialorder %v115, %v202
    %vm240 = vcmp.ge.f32.partialorder %v118, %v206
    %vm241 = vcmp.ge.f32.partialorder %v121, %v210
    %vm242 = vcmp.ge.f32.partialorder %v124, %v214
    %vm243 = vcmp.ge.f32.partialorder %v127, %v218
    %vm244 = vcmp.ge.f32.partialorder %v130, %v222
    %vm245 = vcmp.ge.f32.partialorder %v133, %v226
    %vm246 = vcmp.ge.f32.partialorder %v136, %v230
    %248 = vbcast.lane.b32.xlu0 %v146, 256
    %v249 = vpop.permute.xlu0 %248
    %v250 = vsel %vm239, %v249, 8
    %v251 = vsel %vm240, %v249, 8
    %v252 = vsel %vm241, %v249, 8
    %v253 = vsel %vm242, %v249, 8
    %v254 = vsel %vm243, %v249, 8
    %v255 = vsel %vm244, %v249, 8
    %v256 = vsel %vm245, %v249, 8
    %v257 = vsel %vm246, %v249, 8
    %258 = vset.pattern.permute.xlu0 0
    %259 = vperm.xlu0 %258, %v250
    %v260 = vpop.permute.xlu0 %259
    %261 = vset.pattern.permute.xlu0 0
    %262 = vperm.xlu0 %261, %v251
    %v263 = vpop.permute.xlu0 %262
    %264 = vset.pattern.permute.xlu0 0
    %265 = vperm.xlu0 %264, %v252
    %v266 = vpop.permute.xlu0 %265
    %267 = vset.pattern.permute.xlu0 0
    %268 = vperm.xlu0 %267, %v253
    %v269 = vpop.permute.xlu0 %268
    %270 = vset.pattern.permute.xlu0 0
    %271 = vperm.xlu0 %270, %v254
    %v272 = vpop.permute.xlu0 %271
    %273 = vset.pattern.permute.xlu0 0
    %274 = vperm.xlu0 %273, %v255
    %v275 = vpop.permute.xlu0 %274
    %276 = vset.pattern.permute.xlu0 0
    %277 = vperm.xlu0 %276, %v256
    %v278 = vpop.permute.xlu0 %277
    %279 = vset.pattern.permute.xlu0 0
    %280 = vperm.xlu0 %279, %v257
    %v281 = vpop.permute.xlu0 %280
    %v282 = vlaneseq
    %v283 = vshrl.u32 %v282, 7
    %v284 = vsub.s32 %v146, %v283
    %v285 = vrot.slane %v260, %v284
    %v286 = vlaneseq
    %v287 = vshrl.u32 %v286, 7
    %v288 = vsub.s32 %v146, %v287
    %v289 = vrot.slane %v263, %v288
    %v290 = vlaneseq
    %v291 = vshrl.u32 %v290, 7
    %v292 = vsub.s32 %v146, %v291
    %v293 = vrot.slane %v266, %v292
    %v294 = vlaneseq
    %v295 = vshrl.u32 %v294, 7
    %v296 = vsub.s32 %v146, %v295
    %v297 = vrot.slane %v269, %v296
    %v298 = vlaneseq
    %v299 = vshrl.u32 %v298, 7
    %v300 = vsub.s32 %v146, %v299
    %v301 = vrot.slane %v272, %v300
    %v302 = vlaneseq
    %v303 = vshrl.u32 %v302, 7
    %v304 = vsub.s32 %v146, %v303
    %v305 = vrot.slane %v275, %v304
    %v306 = vlaneseq
    %v307 = vshrl.u32 %v306, 7
    %v308 = vsub.s32 %v146, %v307
    %v309 = vrot.slane %v278, %v308
    %v310 = vlaneseq
    %v311 = vshrl.u32 %v310, 7
    %v312 = vsub.s32 %v146, %v311
    %v313 = vrot.slane %v281, %v312
    %v314 = vsel %vm179, %v289, %v285
    %v315 = vsel %vm181, %v293, %v314
    %v316 = vsel %vm183, %v297, %v315
    %v317 = vsel %vm185, %v301, %v316
    %v318 = vsel %vm187, %v305, %v317
    %v319 = vsel %vm189, %v309, %v318
    %v320 = vsel %vm191, %v313, %v319
    %v321 = vsel %vm194, %v320, 2147483647
    %v322 = vand.u32 %v321, 65535
    %v323 = vshra.s32 %v321, 16
    %v324 = vcvt.s32.f32 %v322
    %v325 = vcvt.s32.f32 %v323
    %326 = vmin.xlane.f32.xlu0 %v325
    %v327 = vpop.xlane.xlu0 %326
    %vm328 = vcmp.eq.f32.partialorder %v325, %v327
    %v329 = vsel %vm328, %v324, inf
    %330 = vmin.xlane.f32.xlu0 %v329
    %v331 = vpop.xlane.xlu0 %330
    %v332 = vcvt.f32.s32 %v331
    %v333 = vcvt.f32.s32 %v327
    %v334 = vshll.u32 %v333, 16
    %v335 = vadd.s32 %v334, %v332
    %vm336 = vcmp.eq.s32.totalorder %v146, %v335
    %v337 = vsel %vm336, 1, 0
    %v338 = vcvt.s32.f32 %v337
    %v339 = vlaneseq
    %v340 = vshrl.u32 %v339, 7
    %v341 = vsub.s32 0, %v340
    %v342 = vrot.slane %v338, %v341
    %344 = vbcast.lane.b32.xlu0 %v342, 256
    %v345 = vpop.permute.xlu0 %344
    %v346 = vlaneseq
    %v347 = vshrl.u32 %v346, 7
    %v348 = vsub.s32 1, %v347
    %v349 = vrot.slane %v338, %v348
    %351 = vbcast.lane.b32.xlu0 %v349, 256
    %v352 = vpop.permute.xlu0 %351
    %v353 = vlaneseq
    %v354 = vshrl.u32 %v353, 7
    %v355 = vsub.s32 2, %v354
    %v356 = vrot.slane %v338, %v355
    %358 = vbcast.lane.b32.xlu0 %v356, 256
    %v359 = vpop.permute.xlu0 %358
    %v360 = vlaneseq
    %v361 = vshrl.u32 %v360, 7
    %v362 = vsub.s32 3, %v361
    %v363 = vrot.slane %v338, %v362
    %365 = vbcast.lane.b32.xlu0 %v363, 256
    %v366 = vpop.permute.xlu0 %365
    %v367 = vlaneseq
    %v368 = vshrl.u32 %v367, 7
    %v369 = vsub.s32 4, %v368
    %v370 = vrot.slane %v338, %v369
    %372 = vbcast.lane.b32.xlu0 %v370, 256
    %v373 = vpop.permute.xlu0 %372
    %v374 = vlaneseq
    %v375 = vshrl.u32 %v374, 7
    %v376 = vsub.s32 5, %v375
    %v377 = vrot.slane %v338, %v376
    %379 = vbcast.lane.b32.xlu0 %v377, 256
    %v380 = vpop.permute.xlu0 %379
    %v381 = vlaneseq
    %v382 = vshrl.u32 %v381, 7
    %v383 = vsub.s32 6, %v382
    %v384 = vrot.slane %v338, %v383
    %386 = vbcast.lane.b32.xlu0 %v384, 256
    %v387 = vpop.permute.xlu0 %386
    %v388 = vlaneseq
    %v389 = vshrl.u32 %v388, 7
    %v390 = vsub.s32 7, %v389
    %v391 = vrot.slane %v338, %v390
    %393 = vbcast.lane.b32.xlu0 %v391, 256
    %v394 = vpop.permute.xlu0 %393
    %v395 = vmul.f32 %v345, %v23
    %v396 = vmul.f32 %v352, %v24
    %v397 = vmul.f32 %v359, %v25
    %v398 = vmul.f32 %v366, %v26
    %v399 = vmul.f32 %v373, %v27
    %v400 = vmul.f32 %v380, %v28
    %v401 = vmul.f32 %v387, %v29
    %v402 = vmul.f32 %v394, %v30
    %v403 = vsel %vm31, %v395, 0.0
    %v404 = vrot.slane %v403, 4
    %v405 = vadd.f32 %v403, %v404
    %v406 = vrot.slane %v405, 2
    %v407 = vadd.f32 %v405, %v406
    %v408 = vrot.slane %v407, 1
    %v409 = vadd.f32 %v407, %v408
    %v410 = vsel %vm31, %v396, 0.0
    %v411 = vrot.slane %v410, 4
    %v412 = vadd.f32 %v410, %v411
    %v413 = vrot.slane %v412, 2
    %v414 = vadd.f32 %v412, %v413
    %v415 = vrot.slane %v414, 1
    %v416 = vadd.f32 %v414, %v415
    %v417 = vsel %vm31, %v397, 0.0
    %v418 = vrot.slane %v417, 4
    %v419 = vadd.f32 %v417, %v418
    %v420 = vrot.slane %v419, 2
    %v421 = vadd.f32 %v419, %v420
    %v422 = vrot.slane %v421, 1
    %v423 = vadd.f32 %v421, %v422
    %v424 = vsel %vm31, %v398, 0.0
    %v425 = vrot.slane %v424, 4
    %v426 = vadd.f32 %v424, %v425
    %v427 = vrot.slane %v426, 2
    %v428 = vadd.f32 %v426, %v427
    %v429 = vrot.slane %v428, 1
    %v430 = vadd.f32 %v428, %v429
    %v431 = vsel %vm31, %v399, 0.0
    %v432 = vrot.slane %v431, 4
    %v433 = vadd.f32 %v431, %v432
    %v434 = vrot.slane %v433, 2
    %v435 = vadd.f32 %v433, %v434
    %v436 = vrot.slane %v435, 1
    %v437 = vadd.f32 %v435, %v436
    %v438 = vsel %vm31, %v400, 0.0
    %v439 = vrot.slane %v438, 4
    %v440 = vadd.f32 %v438, %v439
    %v441 = vrot.slane %v440, 2
    %v442 = vadd.f32 %v440, %v441
    %v443 = vrot.slane %v442, 1
    %v444 = vadd.f32 %v442, %v443
    %v445 = vsel %vm31, %v401, 0.0
    %v446 = vrot.slane %v445, 4
    %v447 = vadd.f32 %v445, %v446
    %v448 = vrot.slane %v447, 2
    %v449 = vadd.f32 %v447, %v448
    %v450 = vrot.slane %v449, 1
    %v451 = vadd.f32 %v449, %v450
    %v452 = vsel %vm31, %v402, 0.0
    %v453 = vrot.slane %v452, 4
    %v454 = vadd.f32 %v452, %v453
    %v455 = vrot.slane %v454, 2
    %v456 = vadd.f32 %v454, %v455
    %v457 = vrot.slane %v456, 1
    %v458 = vadd.f32 %v456, %v457
    %v467 = vsel %vm179, %v90, %v89
    %v468 = vsel %vm181, %v91, %v467
    %v469 = vsel %vm183, %v92, %v468
    %v470 = vsel %vm185, %v93, %v469
    %v471 = vsel %vm187, %v94, %v470
    %v472 = vsel %vm189, %v95, %v471
    %v473 = vsel %vm191, %v96, %v472
    %v483 = vsel %vm179, %v416, %v409
    %v484 = vsel %vm181, %v423, %v483
    %v485 = vsel %vm183, %v430, %v484
    %v486 = vsel %vm185, %v437, %v485
    %v487 = vsel %vm187, %v444, %v486
    %v488 = vsel %vm189, %v451, %v487
    %v489 = vsel %vm191, %v458, %v488
    %490 = vrot.lane.b32.xlu0 %v489, 32
    %v491 = vpop.permute.xlu0 %490
    %v493 = vsel %vm31, %v473, %v491
    %vm494 = vcmask 523264
    %495 = vst.msk [vmem:[#allocation5] sm:$0xff] %vm494, %v493
    // Predicated region
    $region10: #{tpu_custom_call.1} parent=1 // pred_check
      _
    $region11: #{tpu_custom_call.1} parent=1 // pred_check_branch
      %497 = sbr.rel (0) target = $region13
    $region12: #{tpu_custom_call.1} parent=1 // pred_region
      %s499 = ssub.s32 128, 128
      %500 = vsyncadd [#allocation4], %s499
      %s502 = sshll.u32 [#allocation5], 4
      %s503 = int_to_ptr.vmem [resolvable:$true] %s502
      %505 = dma.vmem_to_hbm [thread:$0]  %s503, 128, %s1, [#allocation4]
    $region13: #{tpu_custom_call.1} parent=1 // pred_fallthru
      _
    // Predicated region
    $region14: #{tpu_custom_call.1} parent=1 // pred_check
      _
    $region15: #{tpu_custom_call.1} parent=1 // pred_check_branch
      %507 = sbr.rel (0) target = $region17
    $region16: #{tpu_custom_call.1} parent=1 // pred_region
      %508 = dma.done [#allocation4], 128
    $region17: #{tpu_custom_call.1} parent=1 // pred_fallthru
      _
    %509 = vsyncpa [#allocation3], 1
    %510 = vsyncpa [#allocation4], 1

</llo_original>
